<compile_context>
chip_gen: v6e
topology: v6e:2x2x1
jax: 0.10.0
libtpu: 0.0.40
codegen_flags: <defaults>
</compile_context>

<pallas_src>
import functools

import jax
import jax.numpy as jnp
from jax.experimental import pallas as pl
from jax.experimental.pallas import tpu as pltpu

_LANES = 128
_CHUNK_ROWS = 512                    # in-kernel sub-chunk rows (bounds temporaries)
_DEFAULT_BLOCK_BUDGET = 8 << 20      # bytes per input per pipeline buffer


def _row_alignment(dtype):
    """Rows per native sublane tile: 8 (>=32-bit), 16 (bf16/f16), 32 (int8)."""
    bits = jnp.dtype(dtype).itemsize * 8
    return 8 * max(32 // min(bits, 32), 1)


def _vmem_capacity_bytes():
    try:
        info = pltpu.get_tpu_info()
        cap = getattr(info, "vmem_capacity_bytes", None)
        if cap:
            return int(cap)
    except Exception:
        pass
    return 128 << 20  # v5e/v6e assumption if the query is unavailable


def _dice_partials_kernel(o_ref, m_ref, inter_ref, denom_ref, *,
                          blocks_per_split, n_blocks, total_rows,
                          block_rows, chunk_rows, needs_mask, needs_valid_check):
    s = pl.program_id(0)            # TensorCore split ("parallel")
    i = pl.program_id(1)            # streaming block within split ("arbitrary")
    b = s * blocks_per_split + i    # global block index (unclamped)

    @pl.when(i == 0)
    def _init():
        inter_ref[...] = jnp.zeros_like(inter_ref)
        denom_ref[...] = jnp.zeros_like(denom_ref)

    n_chunks = block_rows // chunk_rows
    groups = chunk_rows // 8

    def chunk_sums(c, masked):
        start = c * chunk_rows
        o = o_ref[pl.ds(start, chunk_rows), :].astype(jnp.float32)
        m = m_ref[pl.ds(start, chunk_rows), :].astype(jnp.float32)
        if masked:
            row = (b * block_rows + start
                   + jax.lax.broadcasted_iota(jnp.int32, (chunk_rows, _LANES), 0))
            valid = row < total_rows
            o = jnp.where(valid, o, 0.0)
            m = jnp.where(valid, m, 0.0)
        # Collapse the chunk to one (8,128) vreg per quantity (whole-vreg
        # regroup -> pure VPU adds) before accumulating.
        inter = jnp.sum((o * m).reshape(groups, 8, _LANES), axis=0)
        denom = jnp.sum((o + m).reshape(groups, 8, _LANES), axis=0)
        return inter, denom

    def accumulate(masked):
        def body(c, carry):
            ai, ad = carry
            pi, pd = chunk_sums(c, masked)
            return ai + pi, ad + pd

        zero = jnp.zeros((8, _LANES), jnp.float32)
        ai, ad = jax.lax.fori_loop(0, n_chunks, body, (zero, zero), unroll=True)
        inter_ref[...] = inter_ref[...] + ai
        denom_ref[...] = denom_ref[...] + ad

    if needs_mask:
        is_tail = b == n_blocks - 1
        full_cond = jnp.logical_not(is_tail)
        tail_cond = is_tail
        if needs_valid_check:
            valid = b < n_blocks
            full_cond = jnp.logical_and(valid, full_cond)
            tail_cond = jnp.logical_and(valid, tail_cond)

        @pl.when(full_cond)
        def _full():
            accumulate(False)

        @pl.when(tail_cond)
        def _tail():
            accumulate(True)
    elif needs_valid_check:
        @pl.when(b < n_blocks)
        def _guarded():
            accumulate(False)
    else:
        accumulate(False)


def dice_loss(outputs, mask, smooth=1e-08, *,
              block_budget_bytes=_DEFAULT_BLOCK_BUDGET):
    """Pallas TPU implementation of DiceLoss.forward (any input shape/dtype).

    For best bandwidth, pass `mask` in a compact dtype (int8 / bool / bf16):
    the kernel streams the native dtype and casts to f32 in VMEM.
    """
    o_flat = jnp.reshape(outputs, (-1,))
    m_flat = jnp.reshape(mask, (-1,))
    n = o_flat.shape[0]

    def canon(x):
        if x.dtype == jnp.bool_:
            return x.astype(jnp.int8)
        if jnp.dtype(x.dtype).itemsize > 4:  # no 64-bit streaming in-kernel
            return x.astype(jnp.float32 if jnp.issubdtype(x.dtype, jnp.floating)
                            else jnp.int32)
        return x

    o_flat = canon(o_flat)
    m_flat = canon(m_flat)

    align = max(_row_alignment(o_flat.dtype), _row_alignment(m_flat.dtype))
    unit = align * _LANES                 # elements per aligned row-group
    rows = (n // unit) * align            # aligned rows handled by the kernel
    n_main = rows * _LANES                # remainder (< unit) handled in plain JAX

    inter = jnp.float32(0.0)
    denom = jnp.float32(0.0)

    if rows > 0:
        o2d = jnp.reshape(o_flat[:n_main], (rows, _LANES))
        m2d = jnp.reshape(m_flat[:n_main], (rows, _LANES))

        # ---- block sizing: byte budget per input per pipeline buffer -------
        max_item = max(o2d.dtype.itemsize, m2d.dtype.itemsize)
        target_rows = max(align, block_budget_bytes // (_LANES * max_item))
        if rows <= _CHUNK_ROWS:
            block_rows = rows             # single exact block (full-dim)
            chunk_rows = rows
        else:
            chunk_rows = _CHUNK_ROWS
            target_rows = max(chunk_rows, (target_rows // chunk_rows) * chunk_rows)
            block_rows = min(target_rows, (rows // chunk_rows) * chunk_rows)

        # ---- generation-aware VMEM budget ----------------------------------
        vmem_cap = _vmem_capacity_bytes()
        vmem_limit = int(min(96 << 20, (vmem_cap * 3) // 4))  # ~48 MiB on v7x
        per_row_bytes = _LANES * (o2d.dtype.itemsize + m2d.dtype.itemsize)
        headroom = 12 << 20  # chunk temporaries + accumulators + internal scratch
        while (block_rows > chunk_rows
               and 2 * block_rows * per_row_bytes + headroom > vmem_limit):
            block_rows = max(chunk_rows, (block_rows // 2 // chunk_rows) * chunk_rows)

        n_blocks = pl.cdiv(rows, block_rows)
        n_split = 2 if n_blocks >= 2 else 1   # v7x: 2 TCs; sequential elsewhere
        bps = pl.cdiv(n_blocks, n_split)
        needs_valid_check = (n_split * bps) != n_blocks
        needs_mask = (rows % block_rows) != 0

        if needs_valid_check:
            def in_map(s, i):
                return (jnp.minimum(s * bps + i, n_blocks - 1), 0)
        else:
            def in_map(s, i):
                return (s * bps + i, 0)

        kernel = functools.partial(
            _dice_partials_kernel,
            blocks_per_split=bps, n_blocks=n_blocks, total_rows=rows,
            block_rows=block_rows, chunk_rows=chunk_rows,
            needs_mask=needs_mask, needs_valid_check=needs_valid_check)

        inter_p, denom_p = pl.pallas_call(
            kernel,
            out_shape=(jax.ShapeDtypeStruct((n_split, 8, _LANES), jnp.float32),
                       jax.ShapeDtypeStruct((n_split, 8, _LANES), jnp.float32)),
            grid_spec=pltpu.PrefetchScalarGridSpec(
                num_scalar_prefetch=0,
                grid=(n_split, bps),
                in_specs=[pl.BlockSpec((block_rows, _LANES), in_map),
                          pl.BlockSpec((block_rows, _LANES), in_map)],
                out_specs=[pl.BlockSpec((None, 8, _LANES), lambda s, i: (s, 0, 0)),
                           pl.BlockSpec((None, 8, _LANES), lambda s, i: (s, 0, 0))],
            ),
            compiler_params=pltpu.CompilerParams(
                dimension_semantics=("parallel", "arbitrary"),
                vmem_limit_bytes=vmem_limit),
        )(o2d, m2d)

        inter = inter + jnp.sum(inter_p)
        denom = denom + jnp.sum(denom_p)

    if n_main < n:
        # <= (align*128 - 1) leftover elements; plain JAX, negligible cost.
        o_t = o_flat[n_main:].astype(jnp.float32)
        m_t = m_flat[n_main:].astype(jnp.float32)
        inter = inter + jnp.sum(o_t * m_t)
        denom = denom + jnp.sum(o_t) + jnp.sum(m_t)

    smooth = jnp.float32(smooth)
    dice = (2.0 * inter + smooth) / (denom + smooth)
    return 1.0 - dice


def _dice_loss_ref(outputs, mask, smooth=1e-08):
    o = jnp.reshape(outputs, (-1,)).astype(jnp.float32)
    m = jnp.reshape(mask, (-1,)).astype(jnp.float32)
    inter = jnp.sum(o * m)
    dice = (2.0 * inter + smooth) / (jnp.sum(o) + jnp.sum(m) + smooth)
    return 1.0 - dice


if __name__ == "__main__":
    key = jax.random.PRNGKey(0)
    ks = jax.random.split(key, 8)

    def check(name, out, ref, atol=1e-5, rtol=1e-5):
        out = jax.block_until_ready(out)
        ref = jax.block_until_ready(ref)
        assert jnp.allclose(out, ref, atol=atol, rtol=rtol), (name, out, ref)

    # 1) NCHW sigmoid outputs + binary mask (f32/f32), small shape.
    x = jax.nn.sigmoid(jax.random.normal(ks[0], (2, 4, 16, 16), dtype=jnp.float32))
    m = (jax.random.uniform(ks[1], (2, 4, 16, 16)) > 0.5).astype(jnp.float32)
    check("f32", dice_loss(x, m), _dice_loss_ref(x, m))

    # 2) Compact streaming: bf16 outputs + int8 mask (cast happens in VMEM).
    xb = jax.nn.sigmoid(
        jax.random.normal(ks[2], (2, 4, 32, 32), dtype=jnp.float32)).astype(jnp.bfloat16)
    mb = (jax.random.uniform(ks[3], (2, 4, 32, 32)) > 0.5).astype(jnp.int8)
    check("bf16/int8", dice_loss(xb, mb), _dice_loss_ref(xb, mb), atol=1e-4)

    # 3) Element count not a multiple of 128: kernel prefix + plain-JAX tail.
    x2 = jax.nn.sigmoid(jax.random.normal(ks[4], (3, 5, 7, 11), dtype=jnp.float32))
    m2 = (jax.random.uniform(ks[5], (3, 5, 7, 11)) > 0.5).astype(jnp.float32)
    check("ragged", dice_loss(x2, m2), _dice_loss_ref(x2, m2))

    # 4) Multi-block grid + 2-way core split + chunk loop + masked tail block
    #    (small data; block budget shrunk so the multi-block path is exercised).
    x3 = jax.nn.sigmoid(jax.random.normal(ks[6], (17, 4, 64, 64), dtype=jnp.float32))
    m3 = (jax.random.uniform(ks[7], (17, 4, 64, 64)) > 0.5).astype(jnp.float32)
    check("multiblock", dice_loss(x3, m3, block_budget_bytes=1 << 20),
          _dice_loss_ref(x3, m3), atol=1e-4, rtol=1e-4)
    # Same data, smaller budget -> odd block count exercises the index clamp.
    check("clamp", dice_loss(x3, m3, block_budget_bytes=256 << 10),
          _dice_loss_ref(x3, m3), atol=1e-4, rtol=1e-4)

    # 5) Tiny input (< one aligned row-group): pure-JAX fallback path.
    check("tiny", dice_loss(x[:1, :1, :2, :3], m[:1, :1, :2, :3]),
          _dice_loss_ref(x[:1, :1, :2, :3], m[:1, :1, :2, :3]))

    print("KERNEL_OK")
</pallas_src>

<mosaic_0001>
module attributes {stable_mosaic.version = 11 : i64} {
  func.func @_dice_partials_kernel(%arg0: i32, %arg1: i32, %arg2: memref<16x128xf32, #tpu.memory_space<vmem>>, %arg3: memref<16x128xf32, #tpu.memory_space<vmem>>, %arg4: memref<1x8x128xf32, #tpu.memory_space<vmem>>, %arg5: memref<1x8x128xf32, #tpu.memory_space<vmem>>) attributes {dimension_semantics = [#tpu.dimension_semantics<parallel>, #tpu.dimension_semantics<arbitrary>], iteration_bounds = array<i64: 1, 1>, scalar_prefetch = 0 : i64, scratch_operands = 0 : i64, tpu.core_type = #tpu.core_type<tc>, window_params = [{transform_indices = @transform_0, window_bounds = array<i64: 16, 128>}, {transform_indices = @transform_1, window_bounds = array<i64: 16, 128>}, {transform_indices = @transform_2, window_bounds = array<i64: 1, 8, 128>}, {transform_indices = @transform_3, window_bounds = array<i64: 1, 8, 128>}]} {
    %c0_i32 = arith.constant 0 : i32
    %0 = arith.cmpi eq, %arg1, %c0_i32 : i32
    %1 = arith.extui %0 : i1 to i32
    %c0_i32_0 = arith.constant 0 : i32
    %2 = arith.cmpi ne, %1, %c0_i32_0 : i32
    scf.if %2 {
      %cst_17 = arith.constant 0.000000e+00 : f32
      %29 = vector.broadcast %cst_17 : f32 to vector<8x128xf32>
      %c0_18 = arith.constant 0 : index
      %c0_19 = arith.constant 0 : index
      %c0_20 = arith.constant 0 : index
      %30 = vector.load %arg4[%c0_18, %c0_19, %c0_20] : memref<1x8x128xf32, #tpu.memory_space<vmem>>, vector<1x8x128xf32>
      %31 = vector.shape_cast %30 : vector<1x8x128xf32> to vector<8x128xf32>
      %32 = vector.shape_cast %29 : vector<8x128xf32> to vector<1x8x128xf32>
      tpu.vector_store %arg4[%c0_18, %c0_19, %c0_20], %32 {strides = array<i32>} : memref<1x8x128xf32, #tpu.memory_space<vmem>>, vector<1x8x128xf32>,
      %cst_21 = arith.constant 0.000000e+00 : f32
      %33 = vector.broadcast %cst_21 : f32 to vector<8x128xf32>
      %c0_22 = arith.constant 0 : index
      %c0_23 = arith.constant 0 : index
      %c0_24 = arith.constant 0 : index
      %34 = vector.load %arg5[%c0_22, %c0_23, %c0_24] : memref<1x8x128xf32, #tpu.memory_space<vmem>>, vector<1x8x128xf32>
      %35 = vector.shape_cast %34 : vector<1x8x128xf32> to vector<8x128xf32>
      %36 = vector.shape_cast %33 : vector<8x128xf32> to vector<1x8x128xf32>
      tpu.vector_store %arg5[%c0_22, %c0_23, %c0_24], %36 {strides = array<i32>} : memref<1x8x128xf32, #tpu.memory_space<vmem>>, vector<1x8x128xf32>,
    } else {
    }
    %cst = arith.constant 0.000000e+00 : f32
    %3 = vector.broadcast %cst : f32 to vector<8x128xf32>
    %c0_i32_1 = arith.constant 0 : i32
    %c16_i32 = arith.constant 16 : i32
    %4 = arith.muli %c0_i32_1, %c16_i32 : i32
    %5 = arith.index_cast %4 : i32 to index
    %c0 = arith.constant 0 : index
    %6 = vector.load %arg2[%5, %c0] : memref<16x128xf32, #tpu.memory_space<vmem>>, vector<16x128xf32>
    %7 = arith.index_cast %4 : i32 to index
    %c0_2 = arith.constant 0 : index
    %8 = vector.load %arg3[%7, %c0_2] : memref<16x128xf32, #tpu.memory_space<vmem>>, vector<16x128xf32>
    %9 = arith.mulf %6, %8 : vector<16x128xf32>
    %10 = vector.shape_cast %9 : vector<16x128xf32> to vector<2x8x128xf32>
    %cst_3 = arith.constant dense<0.000000e+00> : vector<8x128xf32>
    %11 = vector.multi_reduction <add>, %10, %cst_3 [0] : vector<2x8x128xf32> to vector<8x128xf32>
    %12 = arith.addf %6, %8 : vector<16x128xf32>
    %13 = vector.shape_cast %12 : vector<16x128xf32> to vector<2x8x128xf32>
    %cst_4 = arith.constant dense<0.000000e+00> : vector<8x128xf32>
    %14 = vector.multi_reduction <add>, %13, %cst_4 [0] : vector<2x8x128xf32> to vector<8x128xf32>
    %15 = arith.addf %3, %11 : vector<8x128xf32>
    %16 = arith.addf %3, %14 : vector<8x128xf32>
    %c1_i32 = arith.constant 1 : i32
    %c0_5 = arith.constant 0 : index
    %c0_6 = arith.constant 0 : index
    %c0_7 = arith.constant 0 : index
    %17 = vector.load %arg4[%c0_5, %c0_6, %c0_7] : memref<1x8x128xf32, #tpu.memory_space<vmem>>, vector<1x8x128xf32>
    %18 = vector.shape_cast %17 : vector<1x8x128xf32> to vector<8x128xf32>
    %19 = arith.addf %18, %15 : vector<8x128xf32>
    %c0_8 = arith.constant 0 : index
    %c0_9 = arith.constant 0 : index
    %c0_10 = arith.constant 0 : index
    %20 = vector.load %arg4[%c0_8, %c0_9, %c0_10] : memref<1x8x128xf32, #tpu.memory_space<vmem>>, vector<1x8x128xf32>
    %21 = vector.shape_cast %20 : vector<1x8x128xf32> to vector<8x128xf32>
    %22 = vector.shape_cast %19 : vector<8x128xf32> to vector<1x8x128xf32>
    tpu.vector_store %arg4[%c0_8, %c0_9, %c0_10], %22 {strides = array<i32>} : memref<1x8x128xf32, #tpu.memory_space<vmem>>, vector<1x8x128xf32>,
    %c0_11 = arith.constant 0 : index
    %c0_12 = arith.constant 0 : index
    %c0_13 = arith.constant 0 : index
    %23 = vector.load %arg5[%c0_11, %c0_12, %c0_13] : memref<1x8x128xf32, #tpu.memory_space<vmem>>, vector<1x8x128xf32>
    %24 = vector.shape_cast %23 : vector<1x8x128xf32> to vector<8x128xf32>
    %25 = arith.addf %24, %16 : vector<8x128xf32>
    %c0_14 = arith.constant 0 : index
    %c0_15 = arith.constant 0 : index
    %c0_16 = arith.constant 0 : index
    %26 = vector.load %arg5[%c0_14, %c0_15, %c0_16] : memref<1x8x128xf32, #tpu.memory_space<vmem>>, vector<1x8x128xf32>
    %27 = vector.shape_cast %26 : vector<1x8x128xf32> to vector<8x128xf32>
    %28 = vector.shape_cast %25 : vector<8x128xf32> to vector<1x8x128xf32>
    tpu.vector_store %arg5[%c0_14, %c0_15, %c0_16], %28 {strides = array<i32>} : memref<1x8x128xf32, #tpu.memory_space<vmem>>, vector<1x8x128xf32>,
    return
  }
  func.func @transform_0(%arg0: i32, %arg1: i32) -> (i32, i32) {
    %c1_i32 = arith.constant 1 : i32
    %0 = arith.muli %arg0, %c1_i32 : i32
    %1 = arith.addi %0, %arg1 : i32
    %c0_i32 = arith.constant 0 : i32
    %c0_i32_0 = arith.constant 0 : i32
    return %1, %c0_i32 : i32, i32
  }
  func.func @transform_1(%arg0: i32, %arg1: i32) -> (i32, i32) {
    %c1_i32 = arith.constant 1 : i32
    %0 = arith.muli %arg0, %c1_i32 : i32
    %1 = arith.addi %0, %arg1 : i32
    %c0_i32 = arith.constant 0 : i32
    %c0_i32_0 = arith.constant 0 : i32
    return %1, %c0_i32 : i32, i32
  }
  func.func @transform_2(%arg0: i32, %arg1: i32) -> (i32, i32, i32) {
    %c0_i32 = arith.constant 0 : i32
    %c0_i32_0 = arith.constant 0 : i32
    %c0_i32_1 = arith.constant 0 : i32
    return %arg0, %c0_i32, %c0_i32_0 : i32, i32, i32
  }
  func.func @transform_3(%arg0: i32, %arg1: i32) -> (i32, i32, i32) {
    %c0_i32 = arith.constant 0 : i32
    %c0_i32_0 = arith.constant 0 : i32
    %c0_i32_1 = arith.constant 0 : i32
    return %arg0, %c0_i32, %c0_i32_0 : i32, i32, i32
  }
}

</mosaic_0001>

<llo_original>
// kernel: tpu_custom_call.1
$region0: #{tpu_custom_call.1}
  #allocation0 [shape = 'u32[]', space=smem, size = 0x4, offset = 0x4, fixed_abs, tag = 'smem constant byte address 0x4 - core index']
  #allocation1 [shape = 'u32[144,128]{1,0:T(1,128)}', space=vmem, size = 0x12000, scoped, tag = 'internal scratch']
  %s0 = inlined_call_operand.hbm [shape: f32[16,128], index: 0, kind: input, shape index: {}]
  %s1 = inlined_call_operand.hbm [shape: f32[16,128], index: 1, kind: input, shape index: {}]
  %s2 = inlined_call_operand.hbm [shape: f32[1,8,128], index: 2, kind: output, shape index: {0}]
  %s3 = inlined_call_operand.hbm [shape: f32[1,8,128], index: 3, kind: output, shape index: {1}]
  %4 = xla_tuple %s2, %s3
  %s5 = sld [smem:[#allocation0]]
  $region38: #{tpu_custom_call.1} parent=0
    _
  %s7 = ssub.s32 1, %s5
  %s8 = scalar_select 0, %s7, %s5
  $region1: #{tpu_custom_call.1} parent=0
    #allocation2 [shape = 'u8[8192]{0}', space=vmem, size = 0x2000, scoped, tag = 'input window, operand 0, single buffered']
    #allocation3 [shape = 's32[1]{0}', space=sflag, size = 0x4, scoped, tag = 'scoped memory for tpu_custom_call.1']
    #allocation4 [shape = 's32[1]{0}', space=sflag, size = 0x4, scoped, tag = 'scoped memory for tpu_custom_call.1']
    #allocation5 [shape = 'u8[8192]{0}', space=vmem, size = 0x2000, scoped, tag = 'input window, operand 1, single buffered']
    #allocation6 [shape = 's32[1]{0}', space=sflag, size = 0x4, scoped, tag = 'scoped memory for tpu_custom_call.1']
    #allocation7 [shape = 'u8[4096]{0}', space=vmem, size = 0x1000, scoped, tag = 'output window, operand 0, single buffered']
    #allocation8 [shape = 'u8[4096]{0}', space=vmem, size = 0x1000, scoped, tag = 'output window, operand 1, single buffered']
    #allocation9 [shape = 's32[1]{0}', space=sflag, size = 0x4, scoped, tag = 'scoped memory for tpu_custom_call.1']
    %9 = vsyncpa [#allocation3], 0
    %10 = vsyncpa [#allocation6], 0
    %11 = vsyncpa [#allocation4], 0
    %12 = vsyncpa [#allocation9], 0
    // Predicated region
    $region2: #{tpu_custom_call.1} parent=1 // pred_check
      _
    $region3: #{tpu_custom_call.1} parent=1 // pred_check_branch
      %14 = sbr.rel (0) target = $region5
    $region4: #{tpu_custom_call.1} parent=1 // pred_region
      %s15 = sadd.s32 0, 0
      %s16 = smul.u32 2, %s15
      %s18 = ssub.s32 256, 256
      %19 = vsyncadd [#allocation3], %s18
      %s20 = smul.addr %s16, 128
      %s21 = scalar_lea.hbm %s0, %s20
      %s22 = sshll.u32 [#allocation2], 4
      %s23 = int_to_ptr.vmem [resolvable:$true] %s22
      %28 = dma.hbm_to_vmem [thread:$0]  %s21, 256, %s23, [#allocation3], 128, 128, 8
    $region5: #{tpu_custom_call.1} parent=1 // pred_fallthru
      _
    // Predicated region
    $region6: #{tpu_custom_call.1} parent=1 // pred_check
      _
    $region7: #{tpu_custom_call.1} parent=1 // pred_check_branch
      %30 = sbr.rel (0) target = $region9
    $region8: #{tpu_custom_call.1} parent=1 // pred_region
      %s31 = sadd.s32 0, 0
      %s32 = smul.u32 2, %s31
      %s34 = ssub.s32 256, 256
      %35 = vsyncadd [#allocation6], %s34
      %s36 = smul.addr %s32, 128
      %s37 = scalar_lea.hbm %s1, %s36
      %s38 = sshll.u32 [#allocation5], 4
      %s39 = int_to_ptr.vmem [resolvable:$true] %s38
      %44 = dma.hbm_to_vmem [thread:$0]  %s37, 256, %s39, [#allocation6], 128, 128, 8
    $region9: #{tpu_custom_call.1} parent=1 // pred_fallthru
      _
    // Predicated region
    $region10: #{tpu_custom_call.1} parent=1 // pred_check
      _
    $region11: #{tpu_custom_call.1} parent=1 // pred_check_branch
      %46 = sbr.rel (0) target = $region13
    $region12: #{tpu_custom_call.1} parent=1 // pred_region
      %47 = dma.done [#allocation3], 256
    $region13: #{tpu_custom_call.1} parent=1 // pred_fallthru
      _
    // Predicated region
    $region14: #{tpu_custom_call.1} parent=1 // pred_check
      _
    $region15: #{tpu_custom_call.1} parent=1 // pred_check_branch
      %49 = sbr.rel (0) target = $region17
    $region16: #{tpu_custom_call.1} parent=1 // pred_region
      %50 = dma.done [#allocation6], 256
    $region17: #{tpu_custom_call.1} parent=1 // pred_fallthru
      _
    %s51 = sadd.s32 0, 0
    %s52 = smul.u32 2, %s51
    %s53 = sadd.s32 0, 0
    %s54 = smul.u32 2, %s53
    %p55 = scmp.eq.s32.totalorder 0, 0
    // Predicated region
    $region18: #{tpu_custom_call.1} parent=1 // pred_check
      %p56 = pneg %p55
    $region19: #{tpu_custom_call.1} parent=1 // pred_check_branch
      %58 = sbr.rel (%p56) target = $region21
    $region20: #{tpu_custom_call.1} parent=1 // pred_region
      %59 = vst [vmem:[#allocation7] sm:$0xff] 0.0
      %60 = vst [vmem:[#allocation8] sm:$0xff] 0.0
    $region21: #{tpu_custom_call.1} parent=1 // pred_fallthru
      _
    %v61 = vld [vmem:[#allocation2] sm:$0xff]
    %v62 = vld [vmem:[#allocation2 + $0x8] sm:$0xff]
    %v63 = vld [vmem:[#allocation5] sm:$0xff]
    %v64 = vld [vmem:[#allocation5 + $0x8] sm:$0xff]
    %v65 = vmul.f32 %v61, %v63
    %v66 = vmul.f32 %v62, %v64
    %v67 = vadd.f32 %v65, %v66
    %v68 = vadd.f32 %v61, %v63
    %v69 = vadd.f32 %v62, %v64
    %v70 = vadd.f32 %v68, %v69
    %v71 = vadd.f32 %v67, 0.0
    %v72 = vadd.f32 %v70, 0.0
    %v73 = vld [vmem:[#allocation7] sm:$0xff]
    %v74 = vadd.f32 %v73, %v71
    %75 = vst [vmem:[#allocation7] sm:$0xff] %v74
    %v76 = vld [vmem:[#allocation8] sm:$0xff]
    %v77 = vadd.f32 %v76, %v72
    %78 = vst [vmem:[#allocation8] sm:$0xff] %v77
    // Predicated region
    $region22: #{tpu_custom_call.1} parent=1 // pred_check
      _
    $region23: #{tpu_custom_call.1} parent=1 // pred_check_branch
      %80 = sbr.rel (0) target = $region25
    $region24: #{tpu_custom_call.1} parent=1 // pred_region
      %s82 = ssub.s32 128, 128
      %83 = vsyncadd [#allocation4], %s82
      %s85 = sshll.u32 [#allocation7], 4
      %s86 = int_to_ptr.vmem [resolvable:$true] %s85
      %88 = dma.vmem_to_hbm [thread:$0]  %s86, 128, %s2, [#allocation4]
    $region25: #{tpu_custom_call.1} parent=1 // pred_fallthru
      _
    // Predicated region
    $region26: #{tpu_custom_call.1} parent=1 // pred_check
      _
    $region27: #{tpu_custom_call.1} parent=1 // pred_check_branch
      %90 = sbr.rel (0) target = $region29
    $region28: #{tpu_custom_call.1} parent=1 // pred_region
      %s92 = ssub.s32 128, 128
      %93 = vsyncadd [#allocation9], %s92
      %s95 = sshll.u32 [#allocation8], 4
      %s96 = int_to_ptr.vmem [resolvable:$true] %s95
      %98 = dma.vmem_to_hbm [thread:$0]  %s96, 128, %s3, [#allocation9]
    $region29: #{tpu_custom_call.1} parent=1 // pred_fallthru
      _
    // Predicated region
    $region30: #{tpu_custom_call.1} parent=1 // pred_check
      _
    $region31: #{tpu_custom_call.1} parent=1 // pred_check_branch
      %100 = sbr.rel (0) target = $region33
    $region32: #{tpu_custom_call.1} parent=1 // pred_region
      %101 = dma.done [#allocation4], 128
    $region33: #{tpu_custom_call.1} parent=1 // pred_fallthru
      _
    // Predicated region
    $region34: #{tpu_custom_call.1} parent=1 // pred_check
      _
    $region35: #{tpu_custom_call.1} parent=1 // pred_check_branch
      %103 = sbr.rel (0) target = $region37
    $region36: #{tpu_custom_call.1} parent=1 // pred_region
      %104 = dma.done [#allocation9], 128
    $region37: #{tpu_custom_call.1} parent=1 // pred_fallthru
      _
    %105 = vsyncpa [#allocation3], 1
    %106 = vsyncpa [#allocation6], 1
    %107 = vsyncpa [#allocation4], 1
    %108 = vsyncpa [#allocation9], 1

</llo_original>
